<compile_context>
chip_gen: v7x
topology: tpu7x:2x2x1
jax: 0.10.0
libtpu: 0.0.40
codegen_flags: <defaults>
</compile_context>

<pallas_src>
import functools

import jax
import jax.numpy as jnp
from jax import lax
from jax.experimental import pallas as pl
from jax.experimental.pallas import tpu as pltpu


def _round_up(x, m):
    return ((x + m - 1) // m) * m


def _cdiv(a, b):
    return (a + b - 1) // b


def _pad_bytes(r, c, itemsize=4):
    """Lane/sublane-padded VMEM footprint of an (r, c) f32 tile."""
    return _round_up(max(r, 1), 8) * _round_up(max(c, 1), 128) * itemsize


def _tpu_caps():
    """(usable VMEM budget in bytes, default num_splits) for this chip."""
    kind = ""
    try:
        kind = jax.devices()[0].device_kind.lower()
    except Exception:
        pass
    if ("v7" in kind) or ("7x" in kind):
        # v7x: 64 MiB physical VMEM per TensorCore, 2 TCs per chip.
        return 48 * 1024 * 1024, 2
    # v5e / v6e: 128 MiB physical VMEM, single TensorCore.
    return 100 * 1024 * 1024, 1


def _sum_mlp_kernel(x_ref, w1_ref, nb1_ref, w2_ref, o_ref, acc_ref, *,
                    n_rows, tile_rows, steps, full_blocks, needs_mask):
    # Hoist ALL grid-position reads to the top of the body: calling
    # pl.program_id inside a pl.when branch breaks interpret-mode lowering.
    s = pl.program_id(0)           # split ("parallel")
    k = pl.program_id(1)           # reduction step ("arbitrary", innermost)
    nk = pl.num_programs(1)
    block_idx = s * steps + k

    @pl.when(k == 0)
    def _():
        acc_ref[...] = jnp.zeros_like(acc_ref)

    # Hot loop: one MXU matmul + one VPU max + elementwise accumulate.
    #   max(x@W1, -b1) == relu(x@W1 + b1) - b1 ; the rows*b1 term is restored
    #   once in the epilogue (saves one full-width VPU add per element/step).
    d = jnp.dot(x_ref[...], w1_ref[...], preferred_element_type=jnp.float32)
    h = jnp.maximum(d, nb1_ref[...])

    if not needs_mask:
        # Every grid step maps to a unique, fully-valid block: no masking.
        acc_ref[...] += h
    else:
        is_full = block_idx < full_blocks

        @pl.when(is_full)
        def _():
            acc_ref[...] += h

        @pl.when(jnp.logical_not(is_full))
        def _():
            # Ragged last block and clamped duplicate blocks: mask invalid
            # rows (valid <= 0 for duplicates -> contributes exactly zero).
            valid = n_rows - block_idx * tile_rows
            row = lax.broadcasted_iota(jnp.int32, acc_ref.shape, 0)
            acc_ref[...] += jnp.where(row < valid, h, 0.0)

    @pl.when(k == nk - 1)
    def _():
        # Folded rows actually accumulated by this split.
        rows_s = jnp.clip(n_rows - s * steps * tile_rows, 0, steps * tile_rows)
        ssum = jnp.sum(acc_ref[...], axis=0, keepdims=True)        # (1, H)
        ssum = ssum - rows_s.astype(jnp.float32) * nb1_ref[...]    # + rows*b1
        part = jnp.dot(ssum, w2_ref[...], preferred_element_type=jnp.float32)
        o_ref[...] = part.reshape(o_ref.shape)


def sum_mlp_mean(x, w1, b1, w2, b2, *, tile_rows=None, num_splits=None):
    """mean(ReLU(x @ w1 + b1) @ w2 + b2, axis=0) as one fused Pallas kernel."""
    n, d_in = x.shape
    d_hidden = w1.shape[1]
    d_out = w2.shape[1]

    if n == 0:
        # torch's mean over an empty dim yields NaN.
        return jnp.full((d_out,), jnp.nan, dtype=x.dtype)

    vmem_cap, default_splits = _tpu_caps()
    if num_splits is None:
        num_splits = default_splits
    num_splits = max(1, int(num_splits))

    # ---- Lane fold ---------------------------------------------------------
    # Largest fold f such that f | N (so the reshape is a free bitcast, no HBM
    # copy ever), f*d_in <= 128 lanes and f*d_hidden <= 256 MXU output lanes.
    max_fold = max(1, min(128 // max(d_in, 1), 256 // max(d_hidden, 1)))
    fold = 1
    for f in range(min(max_fold, n), 0, -1):
        if n % f == 0:
            fold = f
            break

    n_f = n // fold
    kdim = fold * d_in
    hdim = fold * d_hidden

    if fold == 1:
        x_f, w1_f, w2_f = x, w1, w2
        nb1_f = (-b1).reshape(1, d_hidden).astype(jnp.float32)
    else:
        x_f = x.reshape(n_f, kdim)                            # free bitcast
        w1_f = jnp.kron(jnp.eye(fold, dtype=w1.dtype), w1)    # block-diagonal
        nb1_f = (-jnp.tile(b1, fold)).reshape(1, hdim).astype(jnp.float32)
        w2_f = jnp.tile(w2, (fold, 1))   # folds the groups inside the epilogue matmul

    # ---- Tile sizing: ~2 MiB of streamed x per step, within the VMEM cap ----
    lane_k = _round_up(kdim, 128)
    lane_h = _round_up(hdim, 128)
    weights_bytes = (_pad_bytes(kdim, hdim) + _pad_bytes(1, hdim)
                     + _pad_bytes(hdim, d_out) + 2 * _pad_bytes(1, d_out))
    row_bytes = (2 * lane_k + lane_h) * 4      # x (double-buffered) + f32 acc
    budget = max(vmem_cap // 2 - weights_bytes, 1 << 20)

    if tile_rows is None:
        tile_rows = (2 * 1024 * 1024) // (lane_k * 4)
    tile_rows = min(int(tile_rows), budget // row_bytes,
                    _round_up(_cdiv(n_f, num_splits), 8))
    tile_rows = max(8, (tile_rows // 8) * 8)

    n_blocks = _cdiv(n_f, tile_rows)
    steps = _cdiv(n_blocks, num_splits)
    full_blocks = n_f // tile_rows
    needs_mask = (full_blocks * tile_rows != n_f) or (num_splits * steps != n_blocks)

    vmem_needed = (2 * _pad_bytes(tile_rows, kdim)
                   + _pad_bytes(tile_rows, hdim)
                   + weights_bytes + 2 * _pad_bytes(1, d_out))
    vmem_limit = int(min(max(2 * vmem_needed, 16 * 1024 * 1024), vmem_cap))

    kernel = functools.partial(
        _sum_mlp_kernel,
        n_rows=n_f, tile_rows=tile_rows, steps=steps,
        full_blocks=full_blocks, needs_mask=needs_mask)

    def x_index(si, ki):
        # Clamp so duplicate trailing grid steps re-read an in-bounds block;
        # their contribution is masked to zero in the kernel.
        return (jnp.minimum(si * steps + ki, n_blocks - 1), 0)

    # NOTE: if profiling ever shows exposed x DMA at very large tiles,
    # pipeline_mode=pl.Buffered(3) on the x BlockSpec is the next knob.
    parts = pl.pallas_call(
        kernel,
        out_shape=jax.ShapeDtypeStruct((num_splits, 1, d_out), jnp.float32),
        grid_spec=pltpu.PrefetchScalarGridSpec(
            num_scalar_prefetch=0,
            grid=(num_splits, steps),
            in_specs=[
                pl.BlockSpec((tile_rows, kdim), x_index),            # x (streamed)
                pl.BlockSpec((kdim, hdim), lambda si, ki: (0, 0)),   # W1 (resident)
                pl.BlockSpec((1, hdim), lambda si, ki: (0, 0)),      # -b1
                pl.BlockSpec((hdim, d_out), lambda si, ki: (0, 0)),  # W2
            ],
            out_specs=pl.BlockSpec((1, 1, d_out), lambda si, ki: (si, 0, 0)),
            scratch_shapes=[pltpu.VMEM((tile_rows, hdim), jnp.float32)],
        ),
        compiler_params=pltpu.CompilerParams(
            dimension_semantics=("parallel", "arbitrary"),
            vmem_limit_bytes=vmem_limit,
        ),
    )(x_f, w1_f, nb1_f, w2_f)

    # Tiny epilogue in plain JAX: combine f32 per-split partials, scale, bias.
    total = parts.sum(axis=(0, 1))                     # (d_out,) float32
    out = total / jnp.float32(n) + b2.astype(jnp.float32)
    return out.astype(x.dtype)


def _reference(x, w1, b1, w2, b2):
    h = jnp.maximum(x @ w1 + b1, 0.0)
    y = h @ w2 + b2
    return jnp.mean(y, axis=0)


if __name__ == "__main__":
    # TODO(synk): the original Sum wraps an arbitrary subnetwork; a concrete
    # Linear -> ReLU -> Linear subnetwork is instantiated here.
    N, D_IN, D_HIDDEN, D_OUT = 128, 16, 32, 8

    key = jax.random.PRNGKey(0)
    kx, k1, k2, k3, k4 = jax.random.split(key, 5)

    x = jax.random.normal(kx, (N, D_IN), dtype=jnp.float32)
    w1 = jax.random.normal(k1, (D_IN, D_HIDDEN), dtype=jnp.float32) * 0.1
    b1 = jax.random.normal(k2, (D_HIDDEN,), dtype=jnp.float32) * 0.1
    w2 = jax.random.normal(k3, (D_HIDDEN, D_OUT), dtype=jnp.float32) * 0.1
    b2 = jax.random.normal(k4, (D_OUT,), dtype=jnp.float32) * 0.1

    # Case 1: auto tiling / auto splits; N divisible by 8 -> full 8-row fold.
    out = jax.block_until_ready(sum_mlp_mean(x, w1, b1, w2, b2))
    ref = _reference(x, w1, b1, w2, b2)
    assert out.shape == (D_OUT,)
    assert jnp.allclose(out, ref, atol=1e-4, rtol=1e-4), (out, ref)

    # Case 2: N=100 (fold degrades to 5), forced small tiles + 2-way split;
    # exercises the in-kernel ragged-tail mask, clamped duplicate blocks and
    # the per-split partial combine.
    x2 = x[:100]
    out2 = jax.block_until_ready(
        sum_mlp_mean(x2, w1, b1, w2, b2, tile_rows=8, num_splits=2))
    ref2 = _reference(x2, w1, b1, w2, b2)
    assert out2.shape == (D_OUT,)
    assert jnp.allclose(out2, ref2, atol=1e-4, rtol=1e-4), (out2, ref2)

    # Case 3: prime N -> fold=1 (unfolded path) with a ragged last tile.
    x3 = x[:37]
    out3 = jax.block_until_ready(sum_mlp_mean(x3, w1, b1, w2, b2, tile_rows=8))
    ref3 = _reference(x3, w1, b1, w2, b2)
    assert out3.shape == (D_OUT,)
    assert jnp.allclose(out3, ref3, atol=1e-4, rtol=1e-4), (out3, ref3)

    print("KERNEL_OK")
</pallas_src>

<mosaic_0001>
module attributes {stable_mosaic.version = 11 : i64} {
  func.func @_sum_mlp_kernel(%arg0: i32, %arg1: i32, %arg2: memref<16x128xf32, #tpu.memory_space<vmem>>, %arg3: memref<128x256xf32, #tpu.memory_space<vmem>>, %arg4: memref<1x256xf32, #tpu.memory_space<vmem>>, %arg5: memref<256x8xf32, #tpu.memory_space<vmem>>, %arg6: memref<1x1x8xf32, #tpu.memory_space<vmem>>, %arg7: memref<16x256xf32, #tpu.memory_space<vmem>>) attributes {dimension_semantics = [#tpu.dimension_semantics<parallel>, #tpu.dimension_semantics<arbitrary>], iteration_bounds = array<i64: 1, 1>, scalar_prefetch = 0 : i64, scratch_operands = 1 : i64, tpu.core_type = #tpu.core_type<tc>, window_params = [{transform_indices = @transform_0, window_bounds = array<i64: 16, 128>}, {pipeline_mode = #tpu.pipeline_mode<synchronous>, transform_indices = @transform_1, window_bounds = array<i64: 128, 256>}, {pipeline_mode = #tpu.pipeline_mode<synchronous>, transform_indices = @transform_2, window_bounds = array<i64: 1, 256>}, {pipeline_mode = #tpu.pipeline_mode<synchronous>, transform_indices = @transform_3, window_bounds = array<i64: 256, 8>}, {transform_indices = @transform_4, window_bounds = array<i64: 1, 1, 8>}]} {
    %c0_i32 = arith.constant 0 : i32
    %0 = arith.cmpi eq, %arg1, %c0_i32 : i32
    %1 = arith.extui %0 : i1 to i32
    %c0_i32_0 = arith.constant 0 : i32
    %2 = arith.cmpi ne, %1, %c0_i32_0 : i32
    scf.if %2 {
      %cst_12 = arith.constant 0.000000e+00 : f32
      %15 = vector.broadcast %cst_12 : f32 to vector<16x256xf32>
      %c0_13 = arith.constant 0 : index
      %c0_14 = arith.constant 0 : index
      %16 = vector.load %arg7[%c0_13, %c0_14] : memref<16x256xf32, #tpu.memory_space<vmem>>, vector<16x256xf32>
      tpu.vector_store %arg7[%c0_13, %c0_14], %15 {strides = array<i32>} : memref<16x256xf32, #tpu.memory_space<vmem>>, vector<16x256xf32>,
    } else {
    }
    %c0 = arith.constant 0 : index
    %c0_1 = arith.constant 0 : index
    %3 = vector.load %arg2[%c0, %c0_1] : memref<16x128xf32, #tpu.memory_space<vmem>>, vector<16x128xf32>
    %c0_2 = arith.constant 0 : index
    %c0_3 = arith.constant 0 : index
    %4 = vector.load %arg3[%c0_2, %c0_3] : memref<128x256xf32, #tpu.memory_space<vmem>>, vector<128x256xf32>
    %cst = arith.constant dense<0.000000e+00> : vector<16x256xf32>
    %5 = tpu.matmul %3, %4, %cst {dimension_numbers = #tpu.dot_dimension_numbers<[1], [0], [0], [1], [0, 0, 1, 1], [], []>} : vector<16x128xf32>, vector<128x256xf32>, vector<16x256xf32> -> vector<16x256xf32>
    %c0_4 = arith.constant 0 : index
    %c0_5 = arith.constant 0 : index
    %6 = vector.load %arg4[%c0_4, %c0_5] : memref<1x256xf32, #tpu.memory_space<vmem>>, vector<1x256xf32>
    %7 = vector.broadcast %6 : vector<1x256xf32> to vector<16x256xf32>
    %8 = arith.maximumf %5, %7 : vector<16x256xf32>
    %c0_6 = arith.constant 0 : index
    %c0_7 = arith.constant 0 : index
    %9 = vector.load %arg7[%c0_6, %c0_7] : memref<16x256xf32, #tpu.memory_space<vmem>>, vector<16x256xf32>
    %10 = arith.addf %9, %8 : vector<16x256xf32>
    %c0_8 = arith.constant 0 : index
    %c0_9 = arith.constant 0 : index
    %11 = vector.load %arg7[%c0_8, %c0_9] : memref<16x256xf32, #tpu.memory_space<vmem>>, vector<16x256xf32>
    tpu.vector_store %arg7[%c0_8, %c0_9], %10 {strides = array<i32>} : memref<16x256xf32, #tpu.memory_space<vmem>>, vector<16x256xf32>,
    %c0_i32_10 = arith.constant 0 : i32
    %12 = arith.cmpi eq, %arg1, %c0_i32_10 : i32
    %13 = arith.extui %12 : i1 to i32
    %c0_i32_11 = arith.constant 0 : i32
    %14 = arith.cmpi ne, %13, %c0_i32_11 : i32
    scf.if %14 {
      %c1_i32 = arith.constant 1 : i32
      %15 = arith.muli %arg0, %c1_i32 : i32
      %c16_i32 = arith.constant 16 : i32
      %16 = arith.muli %15, %c16_i32 : i32
      %c16_i32_12 = arith.constant 16 : i32
      %17 = arith.subi %c16_i32_12, %16 : i32
      %c0_i32_13 = arith.constant 0 : i32
      %c16_i32_14 = arith.constant 16 : i32
      %18 = arith.maxsi %c0_i32_13, %17 : i32
      %19 = arith.minsi %c16_i32_14, %18 : i32
      %c0_15 = arith.constant 0 : index
      %c0_16 = arith.constant 0 : index
      %20 = vector.load %arg7[%c0_15, %c0_16] : memref<16x256xf32, #tpu.memory_space<vmem>>, vector<16x256xf32>
      %cst_17 = arith.constant dense<0.000000e+00> : vector<256xf32>
      %21 = vector.multi_reduction <add>, %20, %cst_17 [0] : vector<16x256xf32> to vector<256xf32>
      %22 = vector.shape_cast %21 : vector<256xf32> to vector<1x256xf32>
      %23 = arith.sitofp %19 : i32 to f32
      %c0_18 = arith.constant 0 : index
      %c0_19 = arith.constant 0 : index
      %24 = vector.load %arg4[%c0_18, %c0_19] : memref<1x256xf32, #tpu.memory_space<vmem>>, vector<1x256xf32>
      %25 = vector.broadcast %23 : f32 to vector<1x256xf32>
      %26 = arith.mulf %25, %24 : vector<1x256xf32>
      %27 = arith.subf %22, %26 : vector<1x256xf32>
      %c0_20 = arith.constant 0 : index
      %c0_21 = arith.constant 0 : index
      %28 = vector.load %arg5[%c0_20, %c0_21] : memref<256x8xf32, #tpu.memory_space<vmem>>, vector<256x8xf32>
      %cst_22 = arith.constant dense<0.000000e+00> : vector<1x8xf32>
      %29 = tpu.matmul %27, %28, %cst_22 {dimension_numbers = #tpu.dot_dimension_numbers<[1], [0], [0], [1], [0, 0, 1, 1], [], []>} : vector<1x256xf32>, vector<256x8xf32>, vector<1x8xf32> -> vector<1x8xf32>
      %30 = vector.shape_cast %29 : vector<1x8xf32> to vector<1x1x8xf32>
      %c0_23 = arith.constant 0 : index
      %c0_24 = arith.constant 0 : index
      %c0_25 = arith.constant 0 : index
      %31 = vector.load %arg6[%c0_23, %c0_24, %c0_25] : memref<1x1x8xf32, #tpu.memory_space<vmem>>, vector<1x1x8xf32>
      tpu.vector_store %arg6[%c0_23, %c0_24, %c0_25], %30 {strides = array<i32>} : memref<1x1x8xf32, #tpu.memory_space<vmem>>, vector<1x1x8xf32>,
    } else {
    }
    return
  }
  func.func @transform_0(%arg0: i32, %arg1: i32) -> (i32, i32) {
    %c1_i32 = arith.constant 1 : i32
    %0 = arith.muli %arg0, %c1_i32 : i32
    %1 = arith.addi %0, %arg1 : i32
    %c0_i32 = arith.constant 0 : i32
    %2 = arith.minsi %1, %c0_i32 : i32
    %c0_i32_0 = arith.constant 0 : i32
    %c0_i32_1 = arith.constant 0 : i32
    return %2, %c0_i32_0 : i32, i32
  }
  func.func @transform_1(%arg0: i32, %arg1: i32) -> (i32, i32) {
    %c0_i32 = arith.constant 0 : i32
    %c0_i32_0 = arith.constant 0 : i32
    %c0_i32_1 = arith.constant 0 : i32
    return %c0_i32, %c0_i32_0 : i32, i32
  }
  func.func @transform_2(%arg0: i32, %arg1: i32) -> (i32, i32) {
    %c0_i32 = arith.constant 0 : i32
    %c0_i32_0 = arith.constant 0 : i32
    %c0_i32_1 = arith.constant 0 : i32
    return %c0_i32, %c0_i32_0 : i32, i32
  }
  func.func @transform_3(%arg0: i32, %arg1: i32) -> (i32, i32) {
    %c0_i32 = arith.constant 0 : i32
    %c0_i32_0 = arith.constant 0 : i32
    %c0_i32_1 = arith.constant 0 : i32
    return %c0_i32, %c0_i32_0 : i32, i32
  }
  func.func @transform_4(%arg0: i32, %arg1: i32) -> (i32, i32, i32) {
    %c0_i32 = arith.constant 0 : i32
    %c0_i32_0 = arith.constant 0 : i32
    %c0_i32_1 = arith.constant 0 : i32
    return %arg0, %c0_i32, %c0_i32_0 : i32, i32, i32
  }
}

</mosaic_0001>

<llo_original>
// kernel: tpu_custom_call.1
$region0: #{tpu_custom_call.1}
  #allocation0 [shape = 'u32[]', space=smem, size = 0x4, offset = 0x4, fixed_abs, tag = 'smem constant byte address 0x4 - core index']
  #allocation1 [shape = 'u32[144,128]{1,0:T(1,128)}', space=vmem, size = 0x12000, scoped, tag = 'internal scratch']
  #allocation2 [shape = 'f32[16,256]{1,0:T(8,128)}', space=vmem, size = 0x4000, scoped, tag = 'scratch operand']
  %s0 = inlined_call_operand.vmem [shape: f32[16,128], index: 0, kind: input, shape index: {}]
  %s1 = inlined_call_operand.vmem [shape: f32[128,256], index: 1, kind: input, shape index: {}]
  %s2 = inlined_call_operand.vmem [shape: f32[1,256], index: 2, kind: input, shape index: {}]
  %s3 = inlined_call_operand.vmem [shape: f32[256,8], index: 3, kind: input, shape index: {}]
  %s4 = inlined_call_operand.hbm [shape: f32[1,1,8], index: 4, kind: output, shape index: {}]
  %s5 = sld [smem:[#allocation0]]
  $region34: #{tpu_custom_call.1} parent=0
    _
  %s7 = ssub.s32 1, %s5
  %s8 = scalar_select 0, %s7, %s5
  $region1: #{tpu_custom_call.1} parent=0
    #allocation3 [shape = 'u8[512]{0}', space=vmem, size = 0x400, scoped, tag = 'output window, operand 0, single buffered']
    #allocation4 [shape = 's32[1]{0}', space=sflag, size = 0x4, scoped, tag = 'scoped memory for tpu_custom_call.1']
    %9 = vsyncpa [#allocation4], 0
    // Predicated region
    $region2: #{tpu_custom_call.1} parent=1 // pred_check
      _
    $region3: #{tpu_custom_call.1} parent=1 // pred_check_branch
      %11 = sbr.rel (0) target = $region5
    $region4: #{tpu_custom_call.1} parent=1 // pred_region
      %s12 = sadd.s32 0, 0
      %p13 = scmp.lt.s32.totalorder %s12, 0
      %s14 = scalar_select %p13, %s12, 0
      %s15 = smul.u32 2, %s14
      %p16 = scmp.lt.s32.totalorder %s15, 1
      %s17 = scalar_select %p16, %s15, 1
      %s18 = smul.addr %s17, 8
      %s19 = scalar_lea.vmem %s0, %s18
      %s20 = sadd.s32 0, 0
      %p21 = scmp.lt.s32.totalorder %s20, 0
      %s22 = scalar_select %p21, %s20, 0
      %s23 = smul.u32 2, %s22
    $region5: #{tpu_custom_call.1} parent=1 // pred_fallthru
      _
    // Predicated region
    $region6: #{tpu_custom_call.1} parent=1 // pred_check
      _
    $region7: #{tpu_custom_call.1} parent=1 // pred_check_branch
      %25 = sbr.rel (0) target = $region9
    $region8: #{tpu_custom_call.1} parent=1 // pred_region
      _
    $region9: #{tpu_custom_call.1} parent=1 // pred_fallthru
      _
    // Predicated region
    $region10: #{tpu_custom_call.1} parent=1 // pred_check
      _
    $region11: #{tpu_custom_call.1} parent=1 // pred_check_branch
      %27 = sbr.rel (0) target = $region13
    $region12: #{tpu_custom_call.1} parent=1 // pred_region
      _
    $region13: #{tpu_custom_call.1} parent=1 // pred_fallthru
      _
    // Predicated region
    $region14: #{tpu_custom_call.1} parent=1 // pred_check
      _
    $region15: #{tpu_custom_call.1} parent=1 // pred_check_branch
      %29 = sbr.rel (0) target = $region17
    $region16: #{tpu_custom_call.1} parent=1 // pred_region
      _
    $region17: #{tpu_custom_call.1} parent=1 // pred_fallthru
      _
    %s30 = sadd.s32 0, 0
    %p31 = scmp.lt.s32.totalorder %s30, 0
    %s32 = scalar_select %p31, %s30, 0
    %s33 = smul.u32 2, %s32
    %p34 = scmp.lt.s32.totalorder %s33, 1
    %s35 = scalar_select %p34, %s33, 1
    %s36 = smul.addr %s35, 8
    %s37 = scalar_lea.vmem %s0, %s36
    %s38 = sadd.s32 0, 0
    %p39 = scmp.lt.s32.totalorder %s38, 0
    %s40 = scalar_select %p39, %s38, 0
    %s41 = smul.u32 2, %s40
    %p42 = scmp.lt.s32.totalorder %s41, 1
    %s43 = scalar_select %p42, %s41, 1
    %s44 = smul.addr %s43, 8
    %s45 = scalar_lea.vmem %s0, %s44
    %s46 = sadd.s32 0, 0
    %p47 = scmp.lt.s32.totalorder %s46, 0
    %s48 = scalar_select %p47, %s46, 0
    %s49 = smul.u32 2, %s48
    %p50 = scmp.eq.s32.totalorder 0, 0
    // Predicated region
    $region18: #{tpu_custom_call.1} parent=1 // pred_check
      %p51 = pneg %p50
    $region19: #{tpu_custom_call.1} parent=1 // pred_check_branch
      %53 = sbr.rel (%p51) target = $region21
    $region20: #{tpu_custom_call.1} parent=1 // pred_region
      %54 = vst [vmem:[#allocation2] sm:$0xff] 0.0
      %55 = vst [vmem:[#allocation2 + $0x8] sm:$0xff] 0.0
      %56 = vst [vmem:[#allocation2 + $0x10] sm:$0xff] 0.0
      %57 = vst [vmem:[#allocation2 + $0x18] sm:$0xff] 0.0
    $region21: #{tpu_custom_call.1} parent=1 // pred_fallthru
      _
    %v58 = vld [vmem:[%s45] sm:$0xff]
    %v59 = vld [vmem:[%s45 + $0x8] sm:$0xff]
    %v60 = vld [vmem:[%s1] sm:$0xff]
    %v61 = vld [vmem:[%s1 + $0x8] sm:$0xff]
    %v62 = vld [vmem:[%s1 + $0x10] sm:$0xff]
    %v63 = vld [vmem:[%s1 + $0x18] sm:$0xff]
    %v64 = vld [vmem:[%s1 + $0x20] sm:$0xff]
    %v65 = vld [vmem:[%s1 + $0x28] sm:$0xff]
    %v66 = vld [vmem:[%s1 + $0x30] sm:$0xff]
    %v67 = vld [vmem:[%s1 + $0x38] sm:$0xff]
    %v68 = vld [vmem:[%s1 + $0x40] sm:$0xff]
    %v69 = vld [vmem:[%s1 + $0x48] sm:$0xff]
    %v70 = vld [vmem:[%s1 + $0x50] sm:$0xff]
    %v71 = vld [vmem:[%s1 + $0x58] sm:$0xff]
    %v72 = vld [vmem:[%s1 + $0x60] sm:$0xff]
    %v73 = vld [vmem:[%s1 + $0x68] sm:$0xff]
    %v74 = vld [vmem:[%s1 + $0x70] sm:$0xff]
    %v75 = vld [vmem:[%s1 + $0x78] sm:$0xff]
    %v76 = vld [vmem:[%s1 + $0x80] sm:$0xff]
    %v77 = vld [vmem:[%s1 + $0x88] sm:$0xff]
    %v78 = vld [vmem:[%s1 + $0x90] sm:$0xff]
    %v79 = vld [vmem:[%s1 + $0x98] sm:$0xff]
    %v80 = vld [vmem:[%s1 + $0xa0] sm:$0xff]
    %v81 = vld [vmem:[%s1 + $0xa8] sm:$0xff]
    %v82 = vld [vmem:[%s1 + $0xb0] sm:$0xff]
    %v83 = vld [vmem:[%s1 + $0xb8] sm:$0xff]
    %v84 = vld [vmem:[%s1 + $0xc0] sm:$0xff]
    %v85 = vld [vmem:[%s1 + $0xc8] sm:$0xff]
    %v86 = vld [vmem:[%s1 + $0xd0] sm:$0xff]
    %v87 = vld [vmem:[%s1 + $0xd8] sm:$0xff]
    %v88 = vld [vmem:[%s1 + $0xe0] sm:$0xff]
    %v89 = vld [vmem:[%s1 + $0xe8] sm:$0xff]
    %v90 = vld [vmem:[%s1 + $0xf0] sm:$0xff]
    %v91 = vld [vmem:[%s1 + $0xf8] sm:$0xff]
    %92 = vmatprep.subr.mxu0 %v61
    %93 = vmatpush1.msra.mxu0 %v60
    %94 = vmatprep.subr.mxu0 %v63
    %95 = vmatpush1.msra.mxu0 %v62
    %96 = vmatprep.subr.mxu0 %v65
    %97 = vmatpush1.msra.mxu0 %v64
    %98 = vmatprep.subr.mxu0 %v67
    %99 = vmatpush1.msra.mxu0 %v66
    %100 = vmatprep.subr.mxu0 %v69
    %101 = vmatpush1.msra.mxu0 %v68
    %102 = vmatprep.subr.mxu0 %v71
    %103 = vmatpush1.msra.mxu0 %v70
    %104 = vmatprep.subr.mxu0 %v73
    %105 = vmatpush1.msra.mxu0 %v72
    %106 = vmatprep.subr.mxu0 %v75
    %107 = vmatpush1.msra.mxu0 %v74
    %108 = vmatprep.subr.mxu0 %v77
    %109 = vmatpush1.msra.mxu0 %v76
    %110 = vmatprep.subr.mxu0 %v79
    %111 = vmatpush1.msra.mxu0 %v78
    %112 = vmatprep.subr.mxu0 %v81
    %113 = vmatpush1.msra.mxu0 %v80
    %114 = vmatprep.subr.mxu0 %v83
    %115 = vmatpush1.msra.mxu0 %v82
    %116 = vmatprep.subr.mxu0 %v85
    %117 = vmatpush1.msra.mxu0 %v84
    %118 = vmatprep.subr.mxu0 %v87
    %119 = vmatpush1.msra.mxu0 %v86
    %120 = vmatprep.subr.mxu0 %v89
    %121 = vmatpush1.msra.mxu0 %v88
    %122 = vmatprep.subr.mxu0 %v91
    %123 = vmatpush1.msra.mxu0 %v90
    %124 = vmatprep.subr.mxu0 0.0
    %125 = vmatpush1.msra.mxu0 0.0
    %126 = vmatprep.subr.mxu0 0.0
    %127 = vmatpush1.msra.mxu0 0.0
    %128 = vmatprep.subr.mxu0 0.0
    %129 = vmatpush1.msra.mxu0 0.0
    %130 = vmatprep.subr.mxu0 0.0
    %131 = vmatpush1.msra.mxu0 0.0
    %132 = vmatprep.subr.mxu0 0.0
    %133 = vmatpush1.msra.mxu0 0.0
    %134 = vmatprep.subr.mxu0 0.0
    %135 = vmatpush1.msra.mxu0 0.0
    %136 = vmatprep.subr.mxu0 0.0
    %137 = vmatpush1.msra.mxu0 0.0
    %138 = vmatprep.subr.mxu0 0.0
    %139 = vmatpush1.msra.mxu0 0.0
    %140 = vmatprep.subr.mxu0 0.0
    %141 = vmatpush1.msra.mxu0 0.0
    %142 = vmatprep.subr.mxu0 0.0
    %143 = vmatpush1.msra.mxu0 0.0
    %144 = vmatprep.subr.mxu0 0.0
    %145 = vmatpush1.msra.mxu0 0.0
    %146 = vmatprep.subr.mxu0 0.0
    %147 = vmatpush1.msra.mxu0 0.0
    %148 = vmatprep.subr.mxu0 0.0
    %149 = vmatpush1.msra.mxu0 0.0
    %150 = vmatprep.subr.mxu0 0.0
    %151 = vmatpush1.msra.mxu0 0.0
    %152 = vmatprep.subr.mxu0 0.0
    %153 = vmatpush1.msra.mxu0 0.0
    %154 = vmatprep.subr.mxu0 0.0
    %155 = vmatpush1.msra.mxu0 0.0
    %156 = vmatprep.mubr.f32.mxu0 0.0
    %157 = vmatmul.mubr.f32.gmra.mrb[0].mxu0 %v58
    %v158 = vpop.f32.mrb[0].mxu0
    %v159 = vadd.f32 0.0, %v158
    %v160 = vpop.f32.mrb[0].mxu0
    %v161 = vadd.f32 0.0, %v160
    %162 = vmatprep.mubr.f32.mxu0 0.0
    %163 = vmatmul.mubr.f32.gmra.mrb[0].mxu0 %v59
    %v164 = vpop.f32.mrb[0].mxu0
    %v165 = vadd.f32 0.0, %v164
    %v166 = vpop.f32.mrb[0].mxu0
    %v167 = vadd.f32 0.0, %v166
    %168 = vdwg.mxu0
    %v169 = vld [vmem:[%s2] sm:$0x3]
    %v171 = vlaneseq
    %v172 = vshrl.u32 %v171, 7
    %v173 = vsub.s32 0, %v172
    %v174 = vrot.slane %v169, %v173
    %v175 = vlaneseq
    %v176 = vshrl.u32 %v175, 7
    %v177 = vsub.s32 1, %v176
    %v178 = vrot.slane %v169, %v177
    %v181 = vmax.f32 %v159, %v174
    %v182 = vmax.f32 %v161, %v178
    %v183 = vmax.f32 %v165, %v174
    %v184 = vmax.f32 %v167, %v178
    %v185 = vld [vmem:[#allocation2] sm:$0xff]
    %v186 = vld [vmem:[#allocation2 + $0x8] sm:$0xff]
    %v187 = vld [vmem:[#allocation2 + $0x10] sm:$0xff]
    %v188 = vld [vmem:[#allocation2 + $0x18] sm:$0xff]
    %v189 = vadd.f32 %v185, %v181
    %v190 = vadd.f32 %v186, %v182
    %v191 = vadd.f32 %v187, %v183
    %v192 = vadd.f32 %v188, %v184
    %193 = vst [vmem:[#allocation2] sm:$0xff] %v189
    %194 = vst [vmem:[#allocation2 + $0x8] sm:$0xff] %v190
    %195 = vst [vmem:[#allocation2 + $0x10] sm:$0xff] %v191
    %196 = vst [vmem:[#allocation2 + $0x18] sm:$0xff] %v192
    // Predicated region
    $region22: #{tpu_custom_call.1} parent=1 // pred_check
      %p197 = pneg %p50
    $region23: #{tpu_custom_call.1} parent=1 // pred_check_branch
      %199 = sbr.rel (%p197) target = $region25
    $region24: #{tpu_custom_call.1} parent=1 // pred_region
      %s200 = smul.u32 0, 16
      %s201 = ssub.s32 16, %s200
      %p202 = scmp.gt.s32.totalorder %s201, 0
      %s203 = scalar_select %p202, %s201, 0
      %p204 = scmp.lt.s32.totalorder %s203, 16
      %s205 = scalar_select %p204, %s203, 16
      %v206 = vld [vmem:[#allocation2] sm:$0xff]
      %v207 = vld [vmem:[#allocation2 + $0x8] sm:$0xff]
      %v208 = vld [vmem:[#allocation2 + $0x10] sm:$0xff]
      %v209 = vld [vmem:[#allocation2 + $0x18] sm:$0xff]
      %v210 = vadd.f32 %v206, %v208
      %v211 = vrot.slane %v210, 4
      %v212 = vadd.f32 %v210, %v211
      %v213 = vrot.slane %v212, 2
      %v214 = vadd.f32 %v212, %v213
      %v215 = vrot.slane %v214, 1
      %v216 = vadd.f32 %v214, %v215
      %v217 = vadd.f32 %v207, %v209
      %v218 = vrot.slane %v217, 4
      %v219 = vadd.f32 %v217, %v218
      %v220 = vrot.slane %v219, 2
      %v221 = vadd.f32 %v219, %v220
      %v222 = vrot.slane %v221, 1
      %v223 = vadd.f32 %v221, %v222
      %s224 = scvt.s32.f32 %s205
      %v225 = vld [vmem:[%s2] sm:$0x3]
      %v226 = vstv %s224
      %v227 = vmul.f32 %v226, %v225
      %v229 = vlaneseq
      %v230 = vshrl.u32 %v229, 7
      %v231 = vsub.s32 0, %v230
      %v232 = vrot.slane %v227, %v231
      %v233 = vlaneseq
      %v234 = vshrl.u32 %v233, 7
      %v235 = vsub.s32 1, %v234
      %v236 = vrot.slane %v227, %v235
      %v239 = vsub.f32 %v216, %v232
      %v240 = vsub.f32 %v223, %v236
      %v241 = vld [vmem:[%s3] sm:$0xff]
      %v242 = vld [vmem:[%s3 + $0x8] sm:$0xff]
      %v243 = vld [vmem:[%s3 + $0x10] sm:$0xff]
      %v244 = vld [vmem:[%s3 + $0x18] sm:$0xff]
      %v245 = vld [vmem:[%s3 + $0x20] sm:$0xff]
      %v246 = vld [vmem:[%s3 + $0x28] sm:$0xff]
      %v247 = vld [vmem:[%s3 + $0x30] sm:$0xff]
      %v248 = vld [vmem:[%s3 + $0x38] sm:$0xff]
      %v249 = vld [vmem:[%s3 + $0x40] sm:$0xff]
      %v250 = vld [vmem:[%s3 + $0x48] sm:$0xff]
      %v251 = vld [vmem:[%s3 + $0x50] sm:$0xff]
      %v252 = vld [vmem:[%s3 + $0x58] sm:$0xff]
      %v253 = vld [vmem:[%s3 + $0x60] sm:$0xff]
      %v254 = vld [vmem:[%s3 + $0x68] sm:$0xff]
      %v255 = vld [vmem:[%s3 + $0x70] sm:$0xff]
      %v256 = vld [vmem:[%s3 + $0x78] sm:$0xff]
      %v257 = vld [vmem:[%s3 + $0x80] sm:$0xff]
      %v258 = vld [vmem:[%s3 + $0x88] sm:$0xff]
      %v259 = vld [vmem:[%s3 + $0x90] sm:$0xff]
      %v260 = vld [vmem:[%s3 + $0x98] sm:$0xff]
      %v261 = vld [vmem:[%s3 + $0xa0] sm:$0xff]
      %v262 = vld [vmem:[%s3 + $0xa8] sm:$0xff]
      %v263 = vld [vmem:[%s3 + $0xb0] sm:$0xff]
      %v264 = vld [vmem:[%s3 + $0xb8] sm:$0xff]
      %v265 = vld [vmem:[%s3 + $0xc0] sm:$0xff]
      %v266 = vld [vmem:[%s3 + $0xc8] sm:$0xff]
      %v267 = vld [vmem:[%s3 + $0xd0] sm:$0xff]
      %v268 = vld [vmem:[%s3 + $0xd8] sm:$0xff]
      %v269 = vld [vmem:[%s3 + $0xe0] sm:$0xff]
      %v270 = vld [vmem:[%s3 + $0xe8] sm:$0xff]
      %v271 = vld [vmem:[%s3 + $0xf0] sm:$0xff]
      %v272 = vld [vmem:[%s3 + $0xf8] sm:$0xff]
      %273 = vmatprep.subr.mxu0 0.0
      %274 = vmatpush1.msra.mxu0 %v241
      %275 = vmatprep.subr.mxu0 0.0
      %276 = vmatpush1.msra.mxu0 %v242
      %277 = vmatprep.subr.mxu0 0.0
      %278 = vmatpush1.msra.mxu0 %v243
      %279 = vmatprep.subr.mxu0 0.0
      %280 = vmatpush1.msra.mxu0 %v244
      %281 = vmatprep.subr.mxu0 0.0
      %282 = vmatpush1.msra.mxu0 %v245
      %283 = vmatprep.subr.mxu0 0.0
      %284 = vmatpush1.msra.mxu0 %v246
      %285 = vmatprep.subr.mxu0 0.0
      %286 = vmatpush1.msra.mxu0 %v247
      %287 = vmatprep.subr.mxu0 0.0
      %288 = vmatpush1.msra.mxu0 %v248
      %289 = vmatprep.subr.mxu0 0.0
      %290 = vmatpush1.msra.mxu0 %v249
      %291 = vmatprep.subr.mxu0 0.0
      %292 = vmatpush1.msra.mxu0 %v250
      %293 = vmatprep.subr.mxu0 0.0
      %294 = vmatpush1.msra.mxu0 %v251
      %295 = vmatprep.subr.mxu0 0.0
      %296 = vmatpush1.msra.mxu0 %v252
      %297 = vmatprep.subr.mxu0 0.0
      %298 = vmatpush1.msra.mxu0 %v253
      %299 = vmatprep.subr.mxu0 0.0
      %300 = vmatpush1.msra.mxu0 %v254
      %301 = vmatprep.subr.mxu0 0.0
      %302 = vmatpush1.msra.mxu0 %v255
      %303 = vmatprep.subr.mxu0 0.0
      %304 = vmatpush1.msra.mxu0 %v256
      %305 = vmatprep.subr.mxu0 0.0
      %306 = vmatpush1.msra.mxu0 %v257
      %307 = vmatprep.subr.mxu0 0.0
      %308 = vmatpush1.msra.mxu0 %v258
      %309 = vmatprep.subr.mxu0 0.0
      %310 = vmatpush1.msra.mxu0 %v259
      %311 = vmatprep.subr.mxu0 0.0
      %312 = vmatpush1.msra.mxu0 %v260
      %313 = vmatprep.subr.mxu0 0.0
      %314 = vmatpush1.msra.mxu0 %v261
      %315 = vmatprep.subr.mxu0 0.0
      %316 = vmatpush1.msra.mxu0 %v262
      %317 = vmatprep.subr.mxu0 0.0
      %318 = vmatpush1.msra.mxu0 %v263
      %319 = vmatprep.subr.mxu0 0.0
      %320 = vmatpush1.msra.mxu0 %v264
      %321 = vmatprep.subr.mxu0 0.0
      %322 = vmatpush1.msra.mxu0 %v265
      %323 = vmatprep.subr.mxu0 0.0
      %324 = vmatpush1.msra.mxu0 %v266
      %325 = vmatprep.subr.mxu0 0.0
      %326 = vmatpush1.msra.mxu0 %v267
      %327 = vmatprep.subr.mxu0 0.0
      %328 = vmatpush1.msra.mxu0 %v268
      %329 = vmatprep.subr.mxu0 0.0
      %330 = vmatpush1.msra.mxu0 %v269
      %331 = vmatprep.subr.mxu0 0.0
      %332 = vmatpush1.msra.mxu0 %v270
      %333 = vmatprep.subr.mxu0 0.0
      %334 = vmatpush1.msra.mxu0 %v271
      %335 = vmatprep.subr.mxu0 0.0
      %336 = vmatpush1.msra.mxu0 %v272
      %337 = vmatprep.mubr.f32.mxu0 %v240
      %338 = vmatmul.mubr.f32.gmra.mrb[0].mxu0 %v239
      %v339 = vpop.f32.mrb[0].mxu0
      %v340 = vadd.f32 0.0, %v339
      %v341 = vpop.f32.mrb[0].mxu0
      %342 = vdwg.mxu0
      %vm343 = vcmask 57344
      %344 = vst.msk [vmem:[#allocation3] sm:$0x1] %vm343, %v340
    $region25: #{tpu_custom_call.1} parent=1 // pred_fallthru
      _
    // Predicated region
    $region26: #{tpu_custom_call.1} parent=1 // pred_check
      _
    $region27: #{tpu_custom_call.1} parent=1 // pred_check_branch
      %346 = sbr.rel (0) target = $region29
    $region28: #{tpu_custom_call.1} parent=1 // pred_region
      %s348 = ssub.s32 16, 16
      %349 = vsyncadd [#allocation4], %s348
      %s351 = sshll.u32 [#allocation3], 4
      %s352 = int_to_ptr.vmem [resolvable:$true] %s351
      %354 = dma.vmem_to_hbm [thread:$0]  %s352, 16, %s4, [#allocation4]
    $region29: #{tpu_custom_call.1} parent=1 // pred_fallthru
      _
    // Predicated region
    $region30: #{tpu_custom_call.1} parent=1 // pred_check
      _
    $region31: #{tpu_custom_call.1} parent=1 // pred_check_branch
      %356 = sbr.rel (0) target = $region33
    $region32: #{tpu_custom_call.1} parent=1 // pred_region
      %357 = dma.done [#allocation4], 16
    $region33: #{tpu_custom_call.1} parent=1 // pred_fallthru
      _
    %358 = vsyncpa [#allocation4], 1

</llo_original>
